<compile_context>
chip_gen: v6e
topology: v6e:2x2x1
jax: 0.10.0
libtpu: 0.0.40
codegen_flags: <defaults>
</compile_context>

<pallas_src>
import functools
import math

import jax
import jax.numpy as jnp
from jax.experimental import pallas as pl
from jax.experimental.pallas import tpu as pltpu


def _gelu_tanh(x):
    # GELU with tanh approximation, matching nn.GELU(approximate='tanh')
    c = math.sqrt(2.0 / math.pi)
    return 0.5 * x * (1.0 + jnp.tanh(c * (x + 0.044715 * x * x * x)))


def _layer_norm(x, w, b, eps=1e-5):
    mu = jnp.mean(x, axis=-1, keepdims=True)
    var = jnp.mean((x - mu) * (x - mu), axis=-1, keepdims=True)
    return (x - mu) * jax.lax.rsqrt(var + eps) * w + b


# --------------------------- kernel 1: ln_1 + QKV ---------------------------

def ln_qkv_kernel(x_ref, ln1_w_ref, ln1_b_ref,
                  wq_ref, wk_ref, wv_ref, bq_ref, bk_ref, bv_ref,
                  q_ref, k_ref, v_ref):
    x = x_ref[...].astype(jnp.float32)                      # (tt, C)
    xn = _layer_norm(x, ln1_w_ref[...], ln1_b_ref[...])     # f32 stats
    xnb = xn.astype(jnp.bfloat16)                           # MXU operand
    q = jnp.dot(xnb, wq_ref[...], preferred_element_type=jnp.float32) + bq_ref[...]
    k = jnp.dot(xnb, wk_ref[...], preferred_element_type=jnp.float32) + bk_ref[...]
    v = jnp.dot(xnb, wv_ref[...], preferred_element_type=jnp.float32) + bv_ref[...]
    q_ref[...] = q.astype(q_ref.dtype)                      # (tt, C) bf16, lane-dense
    k_ref[...] = k.astype(k_ref.dtype)
    v_ref[...] = v.astype(v_ref.dtype)


# ------------- kernel 2: flash attention + c_proj + ln_2 + MLP --------------

def attn_mlp_kernel(x_ref, q_ref, k_ref, v_ref,
                    wproj_ref, bproj_ref, ln2_w_ref, ln2_b_ref,
                    wfc_ref, bfc_ref, wfc2_ref, bfc2_ref,
                    o_ref,
                    m_scr, l_scr, acc_scr,
                    *, n_head, tq, tk, scale, bf16_eup):
    qi = pl.program_id(1)
    ki = pl.program_id(2)
    hd = q_ref.shape[-1] // n_head

    @pl.when(ki == 0)
    def _init():
        m_scr[...] = jnp.full(m_scr.shape, -jnp.inf, m_scr.dtype)
        l_scr[...] = jnp.zeros(l_scr.shape, l_scr.dtype)
        acc_scr[...] = jnp.zeros(acc_scr.shape, acc_scr.dtype)

    def split_heads(slab):
        # (t, C) lane-dense slab -> (H, t, hd) head-major; per-head lane
        # slices + leading-axis stack (in-VMEM relayout, no HBM traffic).
        return jnp.stack(
            [slab[:, h * hd:(h + 1) * hd] for h in range(n_head)], axis=0)

    def flash_update(apply_mask):
        q = split_heads(q_ref[...])                         # (H, tq, hd) bf16
        k = split_heads(k_ref[...])                         # (H, tk, hd) bf16
        v = split_heads(v_ref[...])                         # (H, tk, hd) bf16
        s = jnp.einsum('hqd,hkd->hqk', q, k,
                       preferred_element_type=jnp.float32) * scale
        if apply_mask:                                      # diagonal tiles only
            row = qi * tq + jax.lax.broadcasted_iota(jnp.int32, (tq, tk), 0)
            col = ki * tk + jax.lax.broadcasted_iota(jnp.int32, (tq, tk), 1)
            s = jnp.where((row >= col)[None, :, :], s, -jnp.inf)

        m_prev = m_scr[...]                                 # (H, tq, 1) f32
        m_new = jnp.maximum(m_prev, jnp.max(s, axis=-1, keepdims=True))
        alpha = jnp.exp(m_prev - m_new)                     # EUP
        p = jnp.exp(s - m_new)                              # (H, tq, tk) f32
        l_scr[...] = alpha * l_scr[...] + jnp.sum(p, axis=-1, keepdims=True)
        acc_scr[...] = alpha * acc_scr[...] + jnp.einsum(
            'hqk,hkd->hqd', p.astype(jnp.bfloat16), v,
            preferred_element_type=jnp.float32)
        m_scr[...] = m_new

    # Strictly below the diagonal: every entry is valid -> no mask.
    @pl.when(ki < qi)
    def _interior():
        flash_update(False)

    # Diagonal tile: masked update, then immediately the epilogue (this is the
    # last valid KV tile for this q tile; tq == tk is asserted in the wrapper).
    @pl.when(ki == qi)
    def _diag_and_finalize():
        flash_update(True)

        inv_l = pl.reciprocal(l_scr[...], approx=True)      # EUP reciprocal
        attn = acc_scr[...] * inv_l                         # (H, tq, hd) f32
        # Head merge to a lane-dense (tq, C) slab, then a single full-depth
        # (tq, C) @ (C, C) c_proj matmul on the MXU.
        attn_fl = jnp.concatenate(
            [attn[h] for h in range(n_head)], axis=-1).astype(jnp.bfloat16)
        y = jnp.dot(attn_fl, wproj_ref[...],
                    preferred_element_type=jnp.float32) + bproj_ref[...]
        x1 = x_ref[...].astype(jnp.float32) + y             # residual 1 (f32)

        xn2 = _layer_norm(x1, ln2_w_ref[...], ln2_b_ref[...])
        h = jnp.dot(xn2.astype(jnp.bfloat16), wfc_ref[...],
                    preferred_element_type=jnp.float32) + bfc_ref[...]
        if bf16_eup:                                        # v6e/v7x: bf16 EUP
            h = _gelu_tanh(h.astype(jnp.bfloat16))
        else:                                               # v5e & older: f32
            h = _gelu_tanh(h)
        mlp = jnp.dot(h.astype(jnp.bfloat16), wfc2_ref[...],
                      preferred_element_type=jnp.float32) + bfc2_ref[...]
        o_ref[...] = (x1 + mlp).astype(o_ref.dtype)         # residual 2


# ------------------------- generation-aware config --------------------------

def _tpu_defaults():
    """(seq_tile, bf16_transcendentals) picked from the TPU generation."""
    try:
        kind = jax.devices()[0].device_kind.lower()
    except Exception:
        kind = ""
    wide_mxu = ("v6" in kind) or ("v7" in kind)   # 2x256x256 MXU, bf16 VPU/EUP
    return (256 if wide_mxu else 128), wide_mxu


def _vmem_cap_bytes():
    try:
        return int(pltpu.get_tpu_info().vmem_capacity_bytes)
    except Exception:
        return 64 * 2 ** 20                        # conservative (v7x)


def _vmem_limit(resident, pipelined, temporaries):
    # Double-buffering (x2) only for pipelined blocks; temporaries counted
    # once; 25% headroom; capped below physical VMEM (v7x is only 64 MiB).
    cap = int(0.85 * _vmem_cap_bytes())
    need = resident + 2 * pipelined + temporaries
    return int(min(max(int(1.25 * need), 16 * 2 ** 20), cap))


# --------------------------------- wrapper ----------------------------------

def gpt2_block(x, params, n_head, *, seq_tile=None):
    (ln1_w, ln1_b, wqkv, bqkv, wproj, bproj,
     ln2_w, ln2_b, wfc, bfc, wfc2, bfc2) = params
    B, T, C = x.shape
    assert C % n_head == 0
    hd = C // n_head

    default_tile, bf16_eup = _tpu_defaults()
    if seq_tile is None:
        seq_tile = default_tile
    tq = tk = min(seq_tile, T)
    assert T % tq == 0 and tq == tk
    xi = x.dtype.itemsize

    # bf16 weight copies for the MXU (also halves the resident VMEM).
    wq, wk, wv = [w.astype(jnp.bfloat16) for w in jnp.split(wqkv, 3, axis=1)]
    bq, bk, bv = jnp.split(bqkv, 3, axis=1)
    wproj_b = wproj.astype(jnp.bfloat16)
    wfc_b = wfc.astype(jnp.bfloat16)
    wfc2_b = wfc2.astype(jnp.bfloat16)

    # Grid-invariant operands: whole array, resident once in VMEM.
    vmem = pl.BlockSpec(memory_space=pltpu.MemorySpace.VMEM)

    def nbytes(*arrs):
        return sum(int(a.size) * a.dtype.itemsize for a in arrs)

    # ------------------- kernel 1: ln_1 + QKV projection -------------------
    pipelined1 = tq * C * xi + 3 * tq * C * 2            # x block + q/k/v blocks
    temps1 = 5 * tq * C * 4                              # xn + 3 matmul f32 temps
    out_sd = jax.ShapeDtypeStruct((B, T, C), jnp.bfloat16)
    q, k, v = pl.pallas_call(
        ln_qkv_kernel,
        out_shape=(out_sd, out_sd, out_sd),
        grid_spec=pltpu.PrefetchScalarGridSpec(
            num_scalar_prefetch=0,
            grid=(B, T // tq),
            in_specs=[
                pl.BlockSpec((None, tq, C), lambda b, ti: (b, ti, 0)),
                vmem, vmem, vmem, vmem, vmem, vmem, vmem, vmem,
            ],
            out_specs=[pl.BlockSpec((None, tq, C), lambda b, ti: (b, ti, 0))] * 3,
        ),
        compiler_params=pltpu.CompilerParams(
            dimension_semantics=("parallel", "parallel"),
            vmem_limit_bytes=_vmem_limit(
                nbytes(ln1_w, ln1_b, wq, wk, wv, bq, bk, bv),
                pipelined1, temps1)),
    )(x, ln1_w, ln1_b, wq, wk, wv, bq, bk, bv)

    # --------- kernel 2: flash attention + c_proj + ln_2 + MLP ----------
    pipelined2 = 2 * tq * C * xi + 3 * tq * C * 2        # x/out blocks + q/k/v
    temps2 = (3 * tq * C * 2                             # head-split q/k/v (bf16)
              + n_head * tq * tk * 6                     # scores f32 + probs bf16
              + n_head * tq * hd * 4                     # normalized attention
              + 3 * tq * C * 4                           # attn_fl / x1 / xn2
              + tq * 4 * C * 6                           # MLP hidden f32 + bf16
              + tq * C * 4                               # mlp out
              + n_head * tq * (hd + 2) * 4)              # scratch accumulators
    weights2 = nbytes(wproj_b, bproj, ln2_w, ln2_b, wfc_b, bfc, wfc2_b, bfc2)

    kernel2 = functools.partial(
        attn_mlp_kernel, n_head=n_head, tq=tq, tk=tk,
        scale=1.0 / math.sqrt(hd), bf16_eup=bf16_eup)

    out = pl.pallas_call(
        kernel2,
        out_shape=jax.ShapeDtypeStruct((B, T, C), x.dtype),
        grid_spec=pltpu.PrefetchScalarGridSpec(
            num_scalar_prefetch=0,
            grid=(B, T // tq, T // tk),
            in_specs=[
                pl.BlockSpec((None, tq, C), lambda b, qi, ki: (b, qi, 0)),
                pl.BlockSpec((None, tq, C), lambda b, qi, ki: (b, qi, 0)),
                # K/V block indices clamped to the causal range: grid steps
                # above the diagonal reuse the resident diagonal block, so the
                # pipeline issues no DMA for masked-out tiles.
                pl.BlockSpec((None, tk, C),
                             lambda b, qi, ki: (b, jnp.minimum(ki, qi), 0)),
                pl.BlockSpec((None, tk, C),
                             lambda b, qi, ki: (b, jnp.minimum(ki, qi), 0)),
                vmem, vmem, vmem, vmem, vmem, vmem, vmem, vmem,
            ],
            out_specs=pl.BlockSpec((None, tq, C), lambda b, qi, ki: (b, qi, 0)),
            scratch_shapes=[
                pltpu.VMEM((n_head, tq, 1), jnp.float32),    # running max
                pltpu.VMEM((n_head, tq, 1), jnp.float32),    # running denom
                pltpu.VMEM((n_head, tq, hd), jnp.float32),   # output accumulator
            ]),
        compiler_params=pltpu.CompilerParams(
            dimension_semantics=("parallel", "parallel", "arbitrary"),
            vmem_limit_bytes=_vmem_limit(weights2, pipelined2, temps2)),
    )(x, q, k, v, wproj_b, bproj, ln2_w, ln2_b, wfc_b, bfc, wfc2_b, bfc2)
    return out


# -------------------------- pure-JAX f32 reference --------------------------

def _reference_block(x, params, n_head):
    (ln1_w, ln1_b, wqkv, bqkv, wproj, bproj,
     ln2_w, ln2_b, wfc, bfc, wfc2, bfc2) = params
    B, T, C = x.shape
    hd = C // n_head

    def ln(z, w, b):
        mu = jnp.mean(z, -1, keepdims=True)
        var = jnp.mean((z - mu) ** 2, -1, keepdims=True)
        return (z - mu) * jax.lax.rsqrt(var + 1e-5) * w + b

    xn = ln(x, ln1_w, ln1_b)
    qkv = xn @ wqkv + bqkv
    q, k, v = jnp.split(qkv, 3, axis=-1)
    q = q.reshape(B, T, n_head, hd).transpose(0, 2, 1, 3)
    k = k.reshape(B, T, n_head, hd).transpose(0, 2, 1, 3)
    v = v.reshape(B, T, n_head, hd).transpose(0, 2, 1, 3)
    att = jnp.einsum('bhqd,bhkd->bhqk', q, k) / math.sqrt(hd)
    mask = jnp.tril(jnp.ones((T, T), bool))
    att = jnp.where(mask, att, -jnp.inf)
    att = jax.nn.softmax(att, axis=-1)
    y = jnp.einsum('bhqk,bhkd->bhqd', att, v).transpose(0, 2, 1, 3).reshape(B, T, C)
    x = x + (y @ wproj + bproj)
    xn2 = ln(x, ln2_w, ln2_b)
    h = _gelu_tanh(xn2 @ wfc + bfc)
    x = x + (h @ wfc2 + bfc2)
    return x


if __name__ == "__main__":
    # Small GPT-2-like config: n_embd=32, n_head=4
    C, n_head = 32, 4

    key = jax.random.PRNGKey(0)
    ks = jax.random.split(key, 14)

    # Parameters (deterministic init). Linear weights stored as (in, out).
    ln1_w = 1.0 + 0.1 * jax.random.normal(ks[1], (1, C), jnp.float32)
    ln1_b = 0.1 * jax.random.normal(ks[2], (1, C), jnp.float32)
    wqkv = 0.02 * jax.random.normal(ks[3], (C, 3 * C), jnp.float32)
    bqkv = 0.01 * jax.random.normal(ks[4], (1, 3 * C), jnp.float32)
    wproj = 0.02 * jax.random.normal(ks[5], (C, C), jnp.float32)
    bproj = 0.01 * jax.random.normal(ks[6], (1, C), jnp.float32)
    ln2_w = 1.0 + 0.1 * jax.random.normal(ks[7], (1, C), jnp.float32)
    ln2_b = 0.1 * jax.random.normal(ks[8], (1, C), jnp.float32)
    wfc = 0.02 * jax.random.normal(ks[9], (C, 4 * C), jnp.float32)
    bfc = 0.01 * jax.random.normal(ks[10], (1, 4 * C), jnp.float32)
    wfc2 = 0.02 * jax.random.normal(ks[11], (4 * C, C), jnp.float32)
    bfc2 = jnp.zeros((1, C), jnp.float32)

    params = (ln1_w, ln1_b, wqkv, bqkv, wproj, bproj,
              ln2_w, ln2_b, wfc, bfc, wfc2, bfc2)

    # Test 1: single-tile grid (B=2, T=8).
    x1 = jax.random.normal(ks[0], (2, 8, C), dtype=jnp.float32)
    out1 = jax.block_until_ready(gpt2_block(x1, params, n_head))
    ref1 = _reference_block(x1, params, n_head)
    assert out1.shape == x1.shape
    err1 = float(jnp.max(jnp.abs(out1 - ref1)))
    assert jnp.allclose(out1, ref1, atol=2e-2, rtol=2e-2), (
        f"single-tile mismatch vs reference (max abs err {err1})")

    # Test 2: multi-tile causal grid (T=32, seq_tile=8) exercising the
    # diagonal / interior / DMA-clamped skipped-tile flash paths.
    x2 = jax.random.normal(ks[12], (2, 32, C), dtype=jnp.float32)
    out2 = jax.block_until_ready(gpt2_block(x2, params, n_head, seq_tile=8))
    ref2 = _reference_block(x2, params, n_head)
    err2 = float(jnp.max(jnp.abs(out2 - ref2)))
    assert jnp.allclose(out2, ref2, atol=2e-2, rtol=2e-2), (
        f"multi-tile mismatch vs reference (max abs err {err2})")

    print("KERNEL_OK")
</pallas_src>

<mosaic_0001>
module attributes {stable_mosaic.version = 11 : i64} {
  func.func @ln_qkv_kernel(%arg0: i32, %arg1: i32, %arg2: memref<1x8x32xf32, #tpu.memory_space<vmem>>, %arg3: memref<1x32xf32, #tpu.memory_space<vmem>>, %arg4: memref<1x32xf32, #tpu.memory_space<vmem>>, %arg5: memref<32x32xbf16, #tpu.memory_space<vmem>>, %arg6: memref<32x32xbf16, #tpu.memory_space<vmem>>, %arg7: memref<32x32xbf16, #tpu.memory_space<vmem>>, %arg8: memref<1x32xf32, #tpu.memory_space<vmem>>, %arg9: memref<1x32xf32, #tpu.memory_space<vmem>>, %arg10: memref<1x32xf32, #tpu.memory_space<vmem>>, %arg11: memref<1x8x32xbf16, #tpu.memory_space<vmem>>, %arg12: memref<1x8x32xbf16, #tpu.memory_space<vmem>>, %arg13: memref<1x8x32xbf16, #tpu.memory_space<vmem>>) attributes {dimension_semantics = [#tpu.dimension_semantics<parallel>, #tpu.dimension_semantics<parallel>], iteration_bounds = array<i64: 2, 1>, scalar_prefetch = 0 : i64, scratch_operands = 0 : i64, tpu.core_type = #tpu.core_type<tc>, window_params = [{transform_indices = @transform_0, window_bounds = array<i64: 1, 8, 32>}, {pipeline_mode = #tpu.pipeline_mode<synchronous>, transform_indices = @transform_1, window_bounds = array<i64: 1, 32>}, {pipeline_mode = #tpu.pipeline_mode<synchronous>, transform_indices = @transform_2, window_bounds = array<i64: 1, 32>}, {pipeline_mode = #tpu.pipeline_mode<synchronous>, transform_indices = @transform_3, window_bounds = array<i64: 32, 32>}, {pipeline_mode = #tpu.pipeline_mode<synchronous>, transform_indices = @transform_4, window_bounds = array<i64: 32, 32>}, {pipeline_mode = #tpu.pipeline_mode<synchronous>, transform_indices = @transform_5, window_bounds = array<i64: 32, 32>}, {pipeline_mode = #tpu.pipeline_mode<synchronous>, transform_indices = @transform_6, window_bounds = array<i64: 1, 32>}, {pipeline_mode = #tpu.pipeline_mode<synchronous>, transform_indices = @transform_7, window_bounds = array<i64: 1, 32>}, {pipeline_mode = #tpu.pipeline_mode<synchronous>, transform_indices = @transform_8, window_bounds = array<i64: 1, 32>}, {transform_indices = @transform_9, window_bounds = array<i64: 1, 8, 32>}, {transform_indices = @transform_10, window_bounds = array<i64: 1, 8, 32>}, {transform_indices = @transform_11, window_bounds = array<i64: 1, 8, 32>}]} {
    %c0 = arith.constant 0 : index
    %c0_0 = arith.constant 0 : index
    %c0_1 = arith.constant 0 : index
    %0 = vector.load %arg2[%c0, %c0_0, %c0_1] : memref<1x8x32xf32, #tpu.memory_space<vmem>>, vector<1x8x32xf32>
    %1 = vector.shape_cast %0 : vector<1x8x32xf32> to vector<8x32xf32>
    %c0_2 = arith.constant 0 : index
    %c0_3 = arith.constant 0 : index
    %2 = vector.load %arg3[%c0_2, %c0_3] : memref<1x32xf32, #tpu.memory_space<vmem>>, vector<1x32xf32>
    %c0_4 = arith.constant 0 : index
    %c0_5 = arith.constant 0 : index
    %3 = vector.load %arg4[%c0_4, %c0_5] : memref<1x32xf32, #tpu.memory_space<vmem>>, vector<1x32xf32>
    %cst = arith.constant dense<0.000000e+00> : vector<8xf32>
    %4 = vector.multi_reduction <add>, %1, %cst [1] : vector<8x32xf32> to vector<8xf32>
    %5 = vector.shape_cast %4 : vector<8xf32> to vector<8x1xf32>
    %cst_6 = arith.constant 3.200000e+01 : f32
    %6 = vector.broadcast %cst_6 : f32 to vector<8x1xf32>
    %7 = arith.divf %5, %6 : vector<8x1xf32>
    %8 = vector.broadcast %7 : vector<8x1xf32> to vector<8x32xf32>
    %9 = arith.subf %1, %8 : vector<8x32xf32>
    %10 = vector.broadcast %7 : vector<8x1xf32> to vector<8x32xf32>
    %11 = arith.subf %1, %10 : vector<8x32xf32>
    %12 = arith.mulf %9, %11 : vector<8x32xf32>
    %cst_7 = arith.constant dense<0.000000e+00> : vector<8xf32>
    %13 = vector.multi_reduction <add>, %12, %cst_7 [1] : vector<8x32xf32> to vector<8xf32>
    %14 = vector.shape_cast %13 : vector<8xf32> to vector<8x1xf32>
    %cst_8 = arith.constant 3.200000e+01 : f32
    %15 = vector.broadcast %cst_8 : f32 to vector<8x1xf32>
    %16 = arith.divf %14, %15 : vector<8x1xf32>
    %17 = vector.broadcast %7 : vector<8x1xf32> to vector<8x32xf32>
    %18 = arith.subf %1, %17 : vector<8x32xf32>
    %cst_9 = arith.constant 9.99999974E-6 : f32
    %19 = vector.broadcast %cst_9 : f32 to vector<8x1xf32>
    %20 = arith.addf %16, %19 : vector<8x1xf32>
    %21 = math.rsqrt %20 : vector<8x1xf32>
    %22 = vector.broadcast %21 : vector<8x1xf32> to vector<8x32xf32>
    %23 = arith.mulf %18, %22 : vector<8x32xf32>
    %24 = vector.broadcast %2 : vector<1x32xf32> to vector<8x32xf32>
    %25 = arith.mulf %23, %24 : vector<8x32xf32>
    %26 = vector.broadcast %3 : vector<1x32xf32> to vector<8x32xf32>
    %27 = arith.addf %25, %26 : vector<8x32xf32>
    %28 = arith.truncf %27 : vector<8x32xf32> to vector<8x32xbf16>
    %c0_10 = arith.constant 0 : index
    %c0_11 = arith.constant 0 : index
    %29 = vector.load %arg5[%c0_10, %c0_11] : memref<32x32xbf16, #tpu.memory_space<vmem>>, vector<32x32xbf16>
    %cst_12 = arith.constant dense<0.000000e+00> : vector<8x32xf32>
    %30 = tpu.matmul %28, %29, %cst_12 {dimension_numbers = #tpu.dot_dimension_numbers<[1], [0], [0], [1], [0, 0, 1, 1], [], []>} : vector<8x32xbf16>, vector<32x32xbf16>, vector<8x32xf32> -> vector<8x32xf32>
    %c0_13 = arith.constant 0 : index
    %c0_14 = arith.constant 0 : index
    %31 = vector.load %arg8[%c0_13, %c0_14] : memref<1x32xf32, #tpu.memory_space<vmem>>, vector<1x32xf32>
    %32 = vector.broadcast %31 : vector<1x32xf32> to vector<8x32xf32>
    %33 = arith.addf %30, %32 : vector<8x32xf32>
    %c0_15 = arith.constant 0 : index
    %c0_16 = arith.constant 0 : index
    %34 = vector.load %arg6[%c0_15, %c0_16] : memref<32x32xbf16, #tpu.memory_space<vmem>>, vector<32x32xbf16>
    %cst_17 = arith.constant dense<0.000000e+00> : vector<8x32xf32>
    %35 = tpu.matmul %28, %34, %cst_17 {dimension_numbers = #tpu.dot_dimension_numbers<[1], [0], [0], [1], [0, 0, 1, 1], [], []>} : vector<8x32xbf16>, vector<32x32xbf16>, vector<8x32xf32> -> vector<8x32xf32>
    %c0_18 = arith.constant 0 : index
    %c0_19 = arith.constant 0 : index
    %36 = vector.load %arg9[%c0_18, %c0_19] : memref<1x32xf32, #tpu.memory_space<vmem>>, vector<1x32xf32>
    %37 = vector.broadcast %36 : vector<1x32xf32> to vector<8x32xf32>
    %38 = arith.addf %35, %37 : vector<8x32xf32>
    %c0_20 = arith.constant 0 : index
    %c0_21 = arith.constant 0 : index
    %39 = vector.load %arg7[%c0_20, %c0_21] : memref<32x32xbf16, #tpu.memory_space<vmem>>, vector<32x32xbf16>
    %cst_22 = arith.constant dense<0.000000e+00> : vector<8x32xf32>
    %40 = tpu.matmul %28, %39, %cst_22 {dimension_numbers = #tpu.dot_dimension_numbers<[1], [0], [0], [1], [0, 0, 1, 1], [], []>} : vector<8x32xbf16>, vector<32x32xbf16>, vector<8x32xf32> -> vector<8x32xf32>
    %c0_23 = arith.constant 0 : index
    %c0_24 = arith.constant 0 : index
    %41 = vector.load %arg10[%c0_23, %c0_24] : memref<1x32xf32, #tpu.memory_space<vmem>>, vector<1x32xf32>
    %42 = vector.broadcast %41 : vector<1x32xf32> to vector<8x32xf32>
    %43 = arith.addf %40, %42 : vector<8x32xf32>
    %44 = arith.truncf %33 : vector<8x32xf32> to vector<8x32xbf16>
    %c0_25 = arith.constant 0 : index
    %c0_26 = arith.constant 0 : index
    %c0_27 = arith.constant 0 : index
    %45 = vector.load %arg11[%c0_25, %c0_26, %c0_27] : memref<1x8x32xbf16, #tpu.memory_space<vmem>>, vector<1x8x32xbf16>
    %46 = vector.shape_cast %45 : vector<1x8x32xbf16> to vector<8x32xbf16>
    %47 = vector.shape_cast %44 : vector<8x32xbf16> to vector<1x8x32xbf16>
    tpu.vector_store %arg11[%c0_25, %c0_26, %c0_27], %47 {strides = array<i32>} : memref<1x8x32xbf16, #tpu.memory_space<vmem>>, vector<1x8x32xbf16>,
    %48 = arith.truncf %38 : vector<8x32xf32> to vector<8x32xbf16>
    %c0_28 = arith.constant 0 : index
    %c0_29 = arith.constant 0 : index
    %c0_30 = arith.constant 0 : index
    %49 = vector.load %arg12[%c0_28, %c0_29, %c0_30] : memref<1x8x32xbf16, #tpu.memory_space<vmem>>, vector<1x8x32xbf16>
    %50 = vector.shape_cast %49 : vector<1x8x32xbf16> to vector<8x32xbf16>
    %51 = vector.shape_cast %48 : vector<8x32xbf16> to vector<1x8x32xbf16>
    tpu.vector_store %arg12[%c0_28, %c0_29, %c0_30], %51 {strides = array<i32>} : memref<1x8x32xbf16, #tpu.memory_space<vmem>>, vector<1x8x32xbf16>,
    %52 = arith.truncf %43 : vector<8x32xf32> to vector<8x32xbf16>
    %c0_31 = arith.constant 0 : index
    %c0_32 = arith.constant 0 : index
    %c0_33 = arith.constant 0 : index
    %53 = vector.load %arg13[%c0_31, %c0_32, %c0_33] : memref<1x8x32xbf16, #tpu.memory_space<vmem>>, vector<1x8x32xbf16>
    %54 = vector.shape_cast %53 : vector<1x8x32xbf16> to vector<8x32xbf16>
    %55 = vector.shape_cast %52 : vector<8x32xbf16> to vector<1x8x32xbf16>
    tpu.vector_store %arg13[%c0_31, %c0_32, %c0_33], %55 {strides = array<i32>} : memref<1x8x32xbf16, #tpu.memory_space<vmem>>, vector<1x8x32xbf16>,
    return
  }
  func.func @transform_0(%arg0: i32, %arg1: i32) -> (i32, i32, i32) {
    %c0_i32 = arith.constant 0 : i32
    %c0_i32_0 = arith.constant 0 : i32
    return %arg0, %arg1, %c0_i32 : i32, i32, i32
  }
  func.func @transform_1(%arg0: i32, %arg1: i32) -> (i32, i32) {
    %c0_i32 = arith.constant 0 : i32
    %c0_i32_0 = arith.constant 0 : i32
    %c0_i32_1 = arith.constant 0 : i32
    return %c0_i32, %c0_i32_0 : i32, i32
  }
  func.func @transform_2(%arg0: i32, %arg1: i32) -> (i32, i32) {
    %c0_i32 = arith.constant 0 : i32
    %c0_i32_0 = arith.constant 0 : i32
    %c0_i32_1 = arith.constant 0 : i32
    return %c0_i32, %c0_i32_0 : i32, i32
  }
  func.func @transform_3(%arg0: i32, %arg1: i32) -> (i32, i32) {
    %c0_i32 = arith.constant 0 : i32
    %c0_i32_0 = arith.constant 0 : i32
    %c0_i32_1 = arith.constant 0 : i32
    return %c0_i32, %c0_i32_0 : i32, i32
  }
  func.func @transform_4(%arg0: i32, %arg1: i32) -> (i32, i32) {
    %c0_i32 = arith.constant 0 : i32
    %c0_i32_0 = arith.constant 0 : i32
    %c0_i32_1 = arith.constant 0 : i32
    return %c0_i32, %c0_i32_0 : i32, i32
  }
  func.func @transform_5(%arg0: i32, %arg1: i32) -> (i32, i32) {
    %c0_i32 = arith.constant 0 : i32
    %c0_i32_0 = arith.constant 0 : i32
    %c0_i32_1 = arith.constant 0 : i32
    return %c0_i32, %c0_i32_0 : i32, i32
  }
  func.func @transform_6(%arg0: i32, %arg1: i32) -> (i32, i32) {
    %c0_i32 = arith.constant 0 : i32
    %c0_i32_0 = arith.constant 0 : i32
    %c0_i32_1 = arith.constant 0 : i32
    return %c0_i32, %c0_i32_0 : i32, i32
  }
  func.func @transform_7(%arg0: i32, %arg1: i32) -> (i32, i32) {
    %c0_i32 = arith.constant 0 : i32
    %c0_i32_0 = arith.constant 0 : i32
    %c0_i32_1 = arith.constant 0 : i32
    return %c0_i32, %c0_i32_0 : i32, i32
  }
  func.func @transform_8(%arg0: i32, %arg1: i32) -> (i32, i32) {
    %c0_i32 = arith.constant 0 : i32
    %c0_i32_0 = arith.constant 0 : i32
    %c0_i32_1 = arith.constant 0 : i32
    return %c0_i32, %c0_i32_0 : i32, i32
  }
  func.func @transform_9(%arg0: i32, %arg1: i32) -> (i32, i32, i32) {
    %c0_i32 = arith.constant 0 : i32
    %c0_i32_0 = arith.constant 0 : i32
    return %arg0, %arg1, %c0_i32 : i32, i32, i32
  }
  func.func @transform_10(%arg0: i32, %arg1: i32) -> (i32, i32, i32) {
    %c0_i32 = arith.constant 0 : i32
    %c0_i32_0 = arith.constant 0 : i32
    return %arg0, %arg1, %c0_i32 : i32, i32, i32
  }
  func.func @transform_11(%arg0: i32, %arg1: i32) -> (i32, i32, i32) {
    %c0_i32 = arith.constant 0 : i32
    %c0_i32_0 = arith.constant 0 : i32
    return %arg0, %arg1, %c0_i32 : i32, i32, i32
  }
}

</mosaic_0001>

<llo_original>
// kernel: tpu_custom_call.1
$region0: #{tpu_custom_call.1}
  #allocation0 [shape = 'u32[]', space=smem, size = 0x4, offset = 0x4, fixed_abs, tag = 'smem constant byte address 0x4 - core index']
  #allocation1 [shape = 'u32[144,128]{1,0:T(1,128)}', space=vmem, size = 0x12000, scoped, tag = 'internal scratch']
  %s0 = inlined_call_operand.hbm [shape: f32[2,8,32], index: 0, kind: input, shape index: {}]
  %s1 = inlined_call_operand.vmem [shape: f32[1,32], index: 1, kind: input, shape index: {}]
  %s2 = inlined_call_operand.vmem [shape: f32[1,32], index: 2, kind: input, shape index: {}]
  %s3 = inlined_call_operand.hbm [shape: bf16[32,32], index: 3, kind: input, shape index: {}]
  %s4 = inlined_call_operand.hbm [shape: bf16[32,32], index: 4, kind: input, shape index: {}]
  %s5 = inlined_call_operand.hbm [shape: bf16[32,32], index: 5, kind: input, shape index: {}]
  %s6 = inlined_call_operand.vmem [shape: f32[1,32], index: 6, kind: input, shape index: {}]
  %s7 = inlined_call_operand.vmem [shape: f32[1,32], index: 7, kind: input, shape index: {}]
  %s8 = inlined_call_operand.vmem [shape: f32[1,32], index: 8, kind: input, shape index: {}]
  %s9 = inlined_call_operand.hbm [shape: bf16[2,8,32], index: 9, kind: output, shape index: {0}]
  %s10 = inlined_call_operand.hbm [shape: bf16[2,8,32], index: 10, kind: output, shape index: {1}]
  %s11 = inlined_call_operand.hbm [shape: bf16[2,8,32], index: 11, kind: output, shape index: {2}]
  %12 = xla_tuple %s9, %s10, %s11
  %s13 = sld [smem:[#allocation0]]
  $region101: #{tpu_custom_call.1} parent=0
    _
  %s15 = ssub.s32 1, %s13
  %s16 = scalar_select 0, %s15, %s13
  $region1: #{tpu_custom_call.1} parent=0
    #allocation2 [shape = 'u8[8192]{0}', space=vmem, size = 0x2000, scoped, tag = 'input window, operand 0']
    #allocation3 [shape = 's32[2]{0}', space=sflag, size = 0x8, scoped, tag = 'scoped memory for tpu_custom_call.1']
    #allocation4 [shape = 's32[2]{0}', space=sflag, size = 0x8, scoped, tag = 'scoped memory for tpu_custom_call.1']
    #allocation5 [shape = 'u8[8192]{0}', space=vmem, size = 0x2000, scoped, tag = 'input window, operand 3, single buffered']
    #allocation6 [shape = 's32[1]{0}', space=sflag, size = 0x4, scoped, tag = 'scoped memory for tpu_custom_call.1']
    #allocation7 [shape = 'u8[8192]{0}', space=vmem, size = 0x2000, scoped, tag = 'input window, operand 4, single buffered']
    #allocation8 [shape = 'u8[8192]{0}', space=vmem, size = 0x2000, scoped, tag = 'input window, operand 5, single buffered']
    #allocation9 [shape = 's32[1]{0}', space=sflag, size = 0x4, scoped, tag = 'scoped memory for tpu_custom_call.1']
    #allocation10 [shape = 'u8[4096]{0}', space=vmem, size = 0x1000, scoped, tag = 'output window, operand 0']
    #allocation11 [shape = 'u8[4096]{0}', space=vmem, size = 0x1000, scoped, tag = 'output window, operand 1']
    #allocation12 [shape = 's32[2]{0}', space=sflag, size = 0x8, scoped, tag = 'scoped memory for tpu_custom_call.1']
    #allocation13 [shape = 'u8[4096]{0}', space=vmem, size = 0x1000, scoped, tag = 'output window, operand 2']
    %17 = vsyncpa [#allocation3], 0
    %s18 = scalar_lea.sflag [#allocation3], 1
    %19 = vsyncpa %s18, 0
    %20 = vsyncpa [#allocation6], 0
    %21 = vsyncpa [#allocation9], 0
    %22 = vsyncpa [#allocation4], 0
    %s23 = scalar_lea.sflag [#allocation4], 1
    %24 = vsyncpa %s23, 0
    %25 = vsyncpa [#allocation12], 0
    %s26 = scalar_lea.sflag [#allocation12], 1
    %27 = vsyncpa %s26, 0
    loop: start=0, step=1, limit=4
    $region2: #{tpu_custom_call.1} parent=1 // loop_pre_header
      _
    $region3: #{tpu_custom_call.1} parent=1 // loop_header
      %s29 = sphi 0, %s33
      %p30 = scmp.ge.s32.totalorder %s29, 4
      %s36 = sphi 0, %s48
      %s37 = sphi 0, %s44
      %s38 = sphi 0, %s36
      %s39 = sphi 0, %s37
      %s40 = sphi 0, %s38
      %s41 = sphi 0, %s39
      %s53 = sphi 0, %s55
      %s56 = sphi 0, %s53
      %s57 = sphi 0, %s56
      %s73 = sphi 0, %s57
      %s77 = sphi 0, %s77
      %s79 = sphi 0, %s77
      %s80 = sphi 0, %s79
      %s94 = sphi 0, %s80
      %s98 = sphi 0, %s98
      %s100 = sphi 0, %s98
      %s101 = sphi 0, %s100
      %s115 = sphi 0, %s101
      %s119 = sphi 0, %s119
      %s121 = sphi 0, %s119
      %s122 = sphi 0, %s121
      %s136 = sphi 0, %s122
      %s140 = sphi 0, %s140
      %s142 = sphi 0, %s140
      %s143 = sphi 0, %s142
      %s157 = sphi 0, %s143
      %s161 = sphi 0, %s161
      %s163 = sphi 0, %s161
      %s164 = sphi 0, %s163
      %s178 = sphi 0, %s164
      %s182 = sphi 0, %s182
      %s184 = sphi 0, %s182
      %s185 = sphi 0, %s184
      %s199 = sphi 0, %s185
      %s203 = sphi 0, %s203
      %s205 = sphi 0, %s203
      %s206 = sphi 0, %s205
      %s220 = sphi 0, %s206
      %s224 = sphi 0, %s224
      %s226 = sphi 0, %s224
      %s227 = sphi 0, %s226
      %s241 = sphi 0, %s227
      %s249 = sphi 0, %s251
      %s252 = sphi 0, %s249
      %s253 = sphi 0, %s252
      %s269 = sphi 0, %s253
      %s277 = sphi 0, %s279
      %s280 = sphi 0, %s277
      %s281 = sphi 0, %s280
      %s297 = sphi 0, %s281
      %s305 = sphi 0, %s307
      %s308 = sphi 0, %s305
      %s309 = sphi 0, %s308
      %s325 = sphi 0, %s309
    $region4: #{tpu_custom_call.1} parent=1 // loop_header_branch
      %32 = sbr.rel (%p30) target = $region8
    $region5: #{tpu_custom_call.1} parent=1 // loop_body
      %s34 = ssub.s32 %s29, 1
      %s35 = ssub.s32 %s29, 2
      %s42 = sadd.s32 1, %s37
      %p43 = scmp.ge.s32.totalorder %s42, 1
      %s44 = scalar_select %p43, 0, %s42
      %s45 = sadd.s32 1, %s36
      %s46 = scalar_select %p43, %s45, %s36
      %p47 = scmp.ge.s32.totalorder %s46, 2
      %s48 = scalar_select %p47, 0, %s46
      %s49 = ssub.s32 %s36, %s48
      %s50 = ssub.s32 %s37, %s44
      %s51 = sor.u32 %s49, %s50
      %p52 = scmp.eq.s32.totalorder %s51, 0
      %s54 = sadd.s32 %s53, 1
      %s55 = scalar_select %p52, %s53, %s54
      %p58 = pneg %p52
      %p59 = scmp.eq.s32.totalorder %s29, 1
      %p60 = por %p58, %p59
      %p61 = scmp.ne.s32.totalorder %s53, %s56
      %p62 = scmp.eq.s32.totalorder %s29, 0
      %p63 = por %p61, %p62
      %p64 = scmp.ne.s32.totalorder %s53, %s56
      %p65 = scmp.eq.s32.totalorder %s34, 1
      %p66 = por %p64, %p65
      %p67 = scmp.ne.s32.totalorder %s56, %s57
      %p68 = scmp.eq.s32.totalorder %s34, 0
      %p69 = por %p67, %p68
      %p70 = scmp.ne.s32.totalorder %s56, %s57
      %p71 = scmp.eq.s32.totalorder %s35, 1
      %p72 = por %p70, %p71
      %p74 = scmp.ne.s32.totalorder %s57, %s73
      %p75 = scmp.eq.s32.totalorder %s35, 0
      %p76 = por %p74, %p75
      %s78 = sadd.s32 %s77, 1
      %p81 = scmp.eq.s32.totalorder %s29, 1
      %p82 = scmp.ne.s32.totalorder %s77, %s79
      %p83 = scmp.eq.s32.totalorder %s29, 0
      %p84 = por %p82, %p83
      %p85 = scmp.ne.s32.totalorder %s77, %s79
      %p86 = scmp.eq.s32.totalorder %s34, 1
      %p87 = por %p85, %p86
      %p88 = scmp.ne.s32.totalorder %s79, %s80
      %p89 = scmp.eq.s32.totalorder %s34, 0
      %p90 = por %p88, %p89
      %p91 = scmp.ne.s32.totalorder %s79, %s80
      %p92 = scmp.eq.s32.totalorder %s35, 1
      %p93 = por %p91, %p92
      %p95 = scmp.ne.s32.totalorder %s80, %s94
      %p96 = scmp.eq.s32.totalorder %s35, 0
      %p97 = por %p95, %p96
      %s99 = sadd.s32 %s98, 1
      %p102 = scmp.eq.s32.totalorder %s29, 1
      %p103 = scmp.ne.s32.totalorder %s98, %s100
      %p104 = scmp.eq.s32.totalorder %s29, 0
      %p105 = por %p103, %p104
      %p106 = scmp.ne.s32.totalorder %s98, %s100
      %p107 = scmp.eq.s32.totalorder %s34, 1
      %p108 = por %p106, %p107
      %p109 = scmp.ne.s32.totalorder %s100, %s101
      %p110 = scmp.eq.s32.totalorder %s34, 0
      %p111 = por %p109, %p110
      %p112 = scmp.ne.s32.totalorder %s100, %s101
      %p113 = scmp.eq.s32.totalorder %s35, 1
      %p114 = por %p112, %p113
      %p116 = scmp.ne.s32.totalorder %s101, %s115
      %p117 = scmp.eq.s32.totalorder %s35, 0
      %p118 = por %p116, %p117
      %s120 = sadd.s32 %s119, 1
      %p123 = scmp.eq.s32.totalorder %s29, 1
      %p124 = scmp.ne.s32.totalorder %s119, %s121
      %p125 = scmp.eq.s32.totalorder %s29, 0
      %p126 = por %p124, %p125
      %p127 = scmp.ne.s32.totalorder %s119, %s121
      %p128 = scmp.eq.s32.totalorder %s34, 1
      %p129 = por %p127, %p128
      %p130 = scmp.ne.s32.totalorder %s121, %s122
      %p131 = scmp.eq.s32.totalorder %s34, 0
      %p132 = por %p130, %p131
      %p133 = scmp.ne.s32.totalorder %s121, %s122
      %p134 = scmp.eq.s32.totalorder %s35, 1
      %p135 = por %p133, %p134
      %p137 = scmp.ne.s32.totalorder %s122, %s136
      %p138 = scmp.eq.s32.totalorder %s35, 0
      %p139 = por %p137, %p138
      %s141 = sadd.s32 %s140, 1
      %p144 = scmp.eq.s32.totalorder %s29, 1
      %p145 = scmp.ne.s32.totalorder %s140, %s142
      %p146 = scmp.eq.s32.totalorder %s29, 0
      %p147 = por %p145, %p146
      %p148 = scmp.ne.s32.totalorder %s140, %s142
      %p149 = scmp.eq.s32.totalorder %s34, 1
      %p150 = por %p148, %p149
      %p151 = scmp.ne.s32.totalorder %s142, %s143
      %p152 = scmp.eq.s32.totalorder %s34, 0
      %p153 = por %p151, %p152
      %p154 = scmp.ne.s32.totalorder %s142, %s143
      %p155 = scmp.eq.s32.totalorder %s35, 1
      %p156 = por %p154, %p155
      %p158 = scmp.ne.s32.totalorder %s143, %s157
      %p159 = scmp.eq.s32.totalorder %s35, 0
      %p160 = por %p158, %p159
      %s162 = sadd.s32 %s161, 1
      %p165 = scmp.eq.s32.totalorder %s29, 1
      %p166 = scmp.ne.s32.totalorder %s161, %s163
      %p167 = scmp.eq.s32.totalorder %s29, 0
      %p168 = por %p166, %p167
      %p169 = scmp.ne.s32.totalorder %s161, %s163
      %p170 = scmp.eq.s32.totalorder %s34, 1
      %p171 = por %p169, %p170
      %p172 = scmp.ne.s32.totalorder %s163, %s164
      %p173 = scmp.eq.s32.totalorder %s34, 0
      %p174 = por %p172, %p173
      %p175 = scmp.ne.s32.totalorder %s163, %s164
      %p176 = scmp.eq.s32.totalorder %s35, 1
      %p177 = por %p175, %p176
      %p179 = scmp.ne.s32.totalorder %s164, %s178
      %p180 = scmp.eq.s32.totalorder %s35, 0
      %p181 = por %p179, %p180
      %s183 = sadd.s32 %s182, 1
      %p186 = scmp.eq.s32.totalorder %s29, 1
      %p187 = scmp.ne.s32.totalorder %s182, %s184
      %p188 = scmp.eq.s32.totalorder %s29, 0
      %p189 = por %p187, %p188
      %p190 = scmp.ne.s32.totalorder %s182, %s184
      %p191 = scmp.eq.s32.totalorder %s34, 1
      %p192 = por %p190, %p191
      %p193 = scmp.ne.s32.totalorder %s184, %s185
      %p194 = scmp.eq.s32.totalorder %s34, 0
      %p195 = por %p193, %p194
      %p196 = scmp.ne.s32.totalorder %s184, %s185
      %p197 = scmp.eq.s32.totalorder %s35, 1
      %p198 = por %p196, %p197
      %p200 = scmp.ne.s32.totalorder %s185, %s199
      %p201 = scmp.eq.s32.totalorder %s35, 0
      %p202 = por %p200, %p201
      %s204 = sadd.s32 %s203, 1
      %p207 = scmp.eq.s32.totalorder %s29, 1
      %p208 = scmp.ne.s32.totalorder %s203, %s205
      %p209 = scmp.eq.s32.totalorder %s29, 0
      %p210 = por %p208, %p209
      %p211 = scmp.ne.s32.totalorder %s203, %s205
      %p212 = scmp.eq.s32.totalorder %s34, 1
      %p213 = por %p211, %p212
      %p214 = scmp.ne.s32.totalorder %s205, %s206
      %p215 = scmp.eq.s32.totalorder %s34, 0
      %p216 = por %p214, %p215
      %p217 = scmp.ne.s32.totalorder %s205, %s206
      %p218 = scmp.eq.s32.totalorder %s35, 1
      %p219 = por %p217, %p218
      %p221 = scmp.ne.s32.totalorder %s206, %s220
      %p222 = scmp.eq.s32.totalorder %s35, 0
      %p223 = por %p221, %p222
      %s225 = sadd.s32 %s224, 1
      %p228 = scmp.eq.s32.totalorder %s29, 1
      %p229 = scmp.ne.s32.totalorder %s224, %s226
      %p230 = scmp.eq.s32.totalorder %s29, 0
      %p231 = por %p229, %p230
      %p232 = scmp.ne.s32.totalorder %s224, %s226
      %p233 = scmp.eq.s32.totalorder %s34, 1
      %p234 = por %p232, %p233
      %p235 = scmp.ne.s32.totalorder %s226, %s227
      %p236 = scmp.eq.s32.totalorder %s34, 0
      %p237 = por %p235, %p236
      %p238 = scmp.ne.s32.totalorder %s226, %s227
      %p239 = scmp.eq.s32.totalorder %s35, 1
      %p240 = por %p238, %p239
      %p242 = scmp.ne.s32.totalorder %s227, %s241
      %p243 = scmp.eq.s32.totalorder %s35, 0
      %p244 = por %p242, %p243
      %s245 = ssub.s32 %s36, %s48
      %s246 = ssub.s32 %s37, %s44
      %s247 = sor.u32 %s245, %s246
      %p248 = scmp.eq.s32.totalorder %s247, 0
      %s250 = sadd.s32 %s249, 1
      %s251 = scalar_select %p248, %s249, %s250
      %p254 = pneg %p248
      %p255 = scmp.eq.s32.totalorder %s29, 1
      %p256 = por %p254, %p255
      %p257 = scmp.ne.s32.totalorder %s249, %s252
      %p258 = scmp.eq.s32.totalorder %s29, 0
      %p259 = por %p257, %p258
      %p260 = scmp.ne.s32.totalorder %s249, %s252
      %p261 = scmp.eq.s32.totalorder %s34, 1
      %p262 = por %p260, %p261
      %p263 = scmp.ne.s32.totalorder %s252, %s253
      %p264 = scmp.eq.s32.totalorder %s34, 0
      %p265 = por %p263, %p264
      %p266 = scmp.ne.s32.totalorder %s252, %s253
      %p267 = scmp.eq.s32.totalorder %s35, 1
      %p268 = por %p266, %p267
      %p270 = scmp.ne.s32.totalorder %s253, %s269
      %p271 = scmp.eq.s32.totalorder %s35, 0
      %p272 = por %p270, %p271
      %s273 = ssub.s32 %s36, %s48
      %s274 = ssub.s32 %s37, %s44
      %s275 = sor.u32 %s273, %s274
      %p276 = scmp.eq.s32.totalorder %s275, 0
      %s278 = sadd.s32 %s277, 1
      %s279 = scalar_select %p276, %s277, %s278
      %p282 = pneg %p276
      %p283 = scmp.eq.s32.totalorder %s29, 1
      %p284 = por %p282, %p283
      %p285 = scmp.ne.s32.totalorder %s277, %s280
      %p286 = scmp.eq.s32.totalorder %s29, 0
      %p287 = por %p285, %p286
      %p288 = scmp.ne.s32.totalorder %s277, %s280
      %p289 = scmp.eq.s32.totalorder %s34, 1
      %p290 = por %p288, %p289
      %p291 = scmp.ne.s32.totalorder %s280, %s281
      %p292 = scmp.eq.s32.totalorder %s34, 0
      %p293 = por %p291, %p292
      %p294 = scmp.ne.s32.totalorder %s280, %s281
      %p295 = scmp.eq.s32.totalorder %s35, 1
      %p296 = por %p294, %p295
      %p298 = scmp.ne.s32.totalorder %s281, %s297
      %p299 = scmp.eq.s32.totalorder %s35, 0
      %p300 = por %p298, %p299
      %s301 = ssub.s32 %s36, %s48
      %s302 = ssub.s32 %s37, %s44
      %s303 = sor.u32 %s301, %s302
      %p304 = scmp.eq.s32.totalorder %s303, 0
      %s306 = sadd.s32 %s305, 1
      %s307 = scalar_select %p304, %s305, %s306
      %p310 = pneg %p304
      %p311 = scmp.eq.s32.totalorder %s29, 1
      %p312 = por %p310, %p311
      %p313 = scmp.ne.s32.totalorder %s305, %s308
      %p314 = scmp.eq.s32.totalorder %s29, 0
      %p315 = por %p313, %p314
      %p316 = scmp.ne.s32.totalorder %s305, %s308
      %p317 = scmp.eq.s32.totalorder %s34, 1
      %p318 = por %p316, %p317
      %p319 = scmp.ne.s32.totalorder %s308, %s309
      %p320 = scmp.eq.s32.totalorder %s34, 0
      %p321 = por %p319, %p320
      %p322 = scmp.ne.s32.totalorder %s308, %s309
      %p323 = scmp.eq.s32.totalorder %s35, 1
      %p324 = por %p322, %p323
      %p326 = scmp.ne.s32.totalorder %s309, %s325
      %p327 = scmp.eq.s32.totalorder %s35, 0
      %p328 = por %p326, %p327
      %p329 = scmp.le.s32.totalorder 1, %s29
      %p330 = scmp.lt.s32.totalorder %s29, 3
      %p331 = pnand %p329, %p330
      %p332 = pneg %p331
      // Predicated region
      $region9: #{tpu_custom_call.1} parent=5 // pred_check
        _
      $region10: #{tpu_custom_call.1} parent=5 // pred_check_branch
        %334 = sbr.rel (%p331) target = $region12
      $region11: #{tpu_custom_call.1} parent=5 // pred_region
        %s335 = ssub.s32 %s29, 1
        // Predicated region
        $region13: #{tpu_custom_call.1} parent=11 // pred_check
          %p336 = pneg %p90
        $region14: #{tpu_custom_call.1} parent=11 // pred_check_branch
          %338 = sbr.rel (%p336) target = $region16
        $region15: #{tpu_custom_call.1} parent=11 // pred_region
          _
        $region16: #{tpu_custom_call.1} parent=11 // pred_fallthru
          _
        // Predicated region
        $region17: #{tpu_custom_call.1} parent=11 // pred_check
          %p339 = pneg %p111
        $region18: #{tpu_custom_call.1} parent=11 // pred_check_branch
          %341 = sbr.rel (%p339) target = $region20
        $region19: #{tpu_custom_call.1} parent=11 // pred_region
          _
        $region20: #{tpu_custom_call.1} parent=11 // pred_fallthru
          _
        // Predicated region
        $region21: #{tpu_custom_call.1} parent=11 // pred_check
          %p342 = pneg %p132
        $region22: #{tpu_custom_call.1} parent=11 // pred_check_branch
          %344 = sbr.rel (%p342) target = $region24
        $region23: #{tpu_custom_call.1} parent=11 // pred_region
          %s346 = ssub.s32 256, 256
          %347 = vsyncadd [#allocation6], %s346
          %s348 = sshll.u32 [#allocation5], 4
          %s349 = int_to_ptr.vmem [resolvable:$true] %s348
          %354 = dma.hbm_to_vmem [thread:$0]  %s3, 256, %s349, [#allocation6], 64, 64, 4
        $region24: #{tpu_custom_call.1} parent=11 // pred_fallthru
          _
        // Predicated region
        $region25: #{tpu_custom_call.1} parent=11 // pred_check
          %p355 = pneg %p153
        $region26: #{tpu_custom_call.1} parent=11 // pred_check_branch
          %357 = sbr.rel (%p355) target = $region28
        $region27: #{tpu_custom_call.1} parent=11 // pred_region
          %s359 = ssub.s32 256, 256
          %360 = vsyncadd [#allocation6], %s359
          %s361 = sshll.u32 [#allocation7], 4
          %s362 = int_to_ptr.vmem [resolvable:$true] %s361
          %367 = dma.hbm_to_vmem [thread:$0]  %s4, 256, %s362, [#allocation6], 64, 64, 4
        $region28: #{tpu_custom_call.1} parent=11 // pred_fallthru
          _
        // Predicated region
        $region29: #{tpu_custom_call.1} parent=11 // pred_check
          %p368 = pneg %p174
        $region30: #{tpu_custom_call.1} parent=11 // pred_check_branch
          %370 = sbr.rel (%p368) target = $region32
        $region31: #{tpu_custom_call.1} parent=11 // pred_region
          %s372 = ssub.s32 256, 256
          %373 = vsyncadd [#allocation9], %s372
          %s374 = sshll.u32 [#allocation8], 4
          %s375 = int_to_ptr.vmem [resolvable:$true] %s374
          %380 = dma.hbm_to_vmem [thread:$0]  %s5, 256, %s375, [#allocation9], 64, 64, 4
        $region32: #{tpu_custom_call.1} parent=11 // pred_fallthru
          _
        // Predicated region
        $region33: #{tpu_custom_call.1} parent=11 // pred_check
          %p381 = pneg %p195
        $region34: #{tpu_custom_call.1} parent=11 // pred_check_branch
          %383 = sbr.rel (%p381) target = $region36
        $region35: #{tpu_custom_call.1} parent=11 // pred_region
          _
        $region36: #{tpu_custom_call.1} parent=11 // pred_fallthru
          _
        // Predicated region
        $region37: #{tpu_custom_call.1} parent=11 // pred_check
          %p384 = pneg %p216
        $region38: #{tpu_custom_call.1} parent=11 // pred_check_branch
          %386 = sbr.rel (%p384) target = $region40
        $region39: #{tpu_custom_call.1} parent=11 // pred_region
          _
        $region40: #{tpu_custom_call.1} parent=11 // pred_fallthru
          _
        // Predicated region
        $region41: #{tpu_custom_call.1} parent=11 // pred_check
          %p387 = pneg %p237
        $region42: #{tpu_custom_call.1} parent=11 // pred_check_branch
          %389 = sbr.rel (%p387) target = $region44
        $region43: #{tpu_custom_call.1} parent=11 // pred_region
          _
        $region44: #{tpu_custom_call.1} parent=11 // pred_fallthru
          _
      $region12: #{tpu_custom_call.1} parent=5 // pred_fallthru
        _
      %p390 = scmp.lt.s32.totalorder %s29, 2
      // Predicated region
      $region45: #{tpu_custom_call.1} parent=5 // pred_check
        %p391 = pneg %p390
      $region46: #{tpu_custom_call.1} parent=5 // pred_check_branch
        %393 = sbr.rel (%p391) target = $region48
      $region47: #{tpu_custom_call.1} parent=5 // pred_region
        // Predicated region
        $region49: #{tpu_custom_call.1} parent=47 // pred_check
          %p394 = pneg %p63
        $region50: #{tpu_custom_call.1} parent=47 // pred_check_branch
          %396 = sbr.rel (%p394) target = $region52
        $region51: #{tpu_custom_call.1} parent=47 // pred_region
          %s397 = sand.u32 %s53, 1
          %s398 = scalar_lea.sflag [#allocation3], %s397
          %s399 = sand.u32 %s53, 1
          %s400 = smul.addr %s399, 8
          %s401 = scalar_lea.vmem [#allocation2], %s400
          %s403 = ssub.s32 128, 128
          %404 = vsyncadd %s398, %s403
          %s405 = sadd.s32 %s37, %s36
          %s406 = smul.addr %s405, 128
          %s407 = scalar_lea.hbm %s0, %s406
          %s409 = sshll.u32 %s401, 4
          %s410 = int_to_ptr.vmem [resolvable:$true] %s409
          %412 = dma.hbm_to_vmem [thread:$0]  %s407, 128, %s410, %s398
        $region52: #{tpu_custom_call.1} parent=47 // pred_fallthru
          _
      $region48: #{tpu_custom_call.1} parent=5 // pred_fallthru
        _
      %p413 = scmp.le.s32.totalorder 1, %s29
      %p414 = scmp.lt.s32.totalorder %s29, 3
      %p415 = pnand %p413, %p414
      %p416 = pneg %p415
      // Predicated region
      $region53: #{tpu_custom_call.1} parent=5 // pred_check
        _
      $region54: #{tpu_custom_call.1} parent=5 // pred_check_branch
        %418 = sbr.rel (%p415) target = $region56
      $region55: #{tpu_custom_call.1} parent=5 // pred_region
        %s419 = ssub.s32 %s29, 1
        %s420 = sand.u32 %s56, 1
        %s421 = scalar_lea.sflag [#allocation3], %s420
        %s422 = sand.u32 %s56, 1
        %s423 = smul.addr %s422, 8
        %s424 = scalar_lea.vmem [#allocation2], %s423
        // Predicated region
        $region57: #{tpu_custom_call.1} parent=55 // pred_check
          %p425 = pneg %p69
        $region58: #{tpu_custom_call.1} parent=55 // pred_check_branch
          %427 = sbr.rel (%p425) target = $region60
        $region59: #{tpu_custom_call.1} parent=55 // pred_region
          %428 = dma.done %s421, 128
        $region60: #{tpu_custom_call.1} parent=55 // pred_fallthru
          _
        // Predicated region
        $region61: #{tpu_custom_call.1} parent=55 // pred_check
          %p429 = pneg %p132
        $region62: #{tpu_custom_call.1} parent=55 // pred_check_branch
          %431 = sbr.rel (%p429) target = $region64
        $region63: #{tpu_custom_call.1} parent=55 // pred_region
          %432 = dma.done [#allocation6], 256
        $region64: #{tpu_custom_call.1} parent=55 // pred_fallthru
          _
        // Predicated region
        $region65: #{tpu_custom_call.1} parent=55 // pred_check
          %p433 = pneg %p153
        $region66: #{tpu_custom_call.1} parent=55 // pred_check_branch
          %435 = sbr.rel (%p433) target = $region68
        $region67: #{tpu_custom_call.1} parent=55 // pred_region
          %436 = dma.done [#allocation6], 256
        $region68: #{tpu_custom_call.1} parent=55 // pred_fallthru
          _
        // Predicated region
        $region69: #{tpu_custom_call.1} parent=55 // pred_check
          %p437 = pneg %p174
        $region70: #{tpu_custom_call.1} parent=55 // pred_check_branch
          %439 = sbr.rel (%p437) target = $region72
        $region71: #{tpu_custom_call.1} parent=55 // pred_region
          %440 = dma.done [#allocation9], 256
        $region72: #{tpu_custom_call.1} parent=55 // pred_fallthru
          _
        %s441 = sand.u32 %s56, 1
        %s442 = scalar_lea.sflag [#allocation3], %s441
        %s443 = sand.u32 %s56, 1
        %s444 = smul.addr %s443, 8
        %s445 = scalar_lea.vmem [#allocation2], %s444
        %p446 = pneg %p69
        %p447 = pneg %p66
        %p448 = pneg %p90
        %p449 = pneg %p87
        %p450 = pneg %p111
        %p451 = pneg %p108
        %p452 = pneg %p132
        %p453 = pneg %p129
        %p454 = pneg %p153
        %p455 = pneg %p150
        %p456 = pneg %p174
        %p457 = pneg %p171
        %p458 = pneg %p195
        %p459 = pneg %p192
        %p460 = pneg %p216
        %p461 = pneg %p213
        %p462 = pneg %p237
        %p463 = pneg %p234
        %p464 = pneg %p265
        %p465 = pneg %p262
        %s466 = sand.u32 %s252, 1
        %s467 = scalar_lea.sflag [#allocation4], %s466
        %s468 = sand.u32 %s252, 1
        %s469 = smul.addr %s468, 4
        %s470 = scalar_lea.vmem [#allocation10], %s469
        %p471 = pneg %p293
        %p472 = pneg %p290
        %s473 = sand.u32 %s34, 1
        %s474 = scalar_lea.sflag [#allocation12], %s473
        %s475 = sand.u32 %s280, 1
        %s476 = smul.addr %s475, 4
        %s477 = scalar_lea.vmem [#allocation11], %s476
        %p478 = pneg %p321
        %p479 = pneg %p318
        %s480 = sand.u32 %s34, 1
        %s481 = scalar_lea.sflag [#allocation12], %s480
        %s482 = sand.u32 %s308, 1
        %s483 = smul.addr %s482, 4
        %s484 = scalar_lea.vmem [#allocation13], %s483
        %v486 = vld [vmem:[%s424] sm:$0xff]
        %v487 = vld [vmem:[%s1] sm:$0x1]
        %v488 = vld [vmem:[%s2] sm:$0x1]
        %vm489 = vcmask 261120
        %v490 = vsel %vm489, %v486, 0.0
        %491 = vadd.xlane.f32.xlu0 %v490
        %v492 = vpop.xlane.xlu0 %491
        %v493 = vrcp.pop 32.0
        %v494 = vmul.f32 %v492, %v493
        %v495 = vsub.f32 %v486, %v494
        %v496 = vmul.f32 %v495, %v495
        %v497 = vsel %vm489, %v496, 0.0
        %498 = vadd.xlane.f32.xlu0 %v497
        %v499 = vpop.xlane.xlu0 %498
        %v500 = vmul.f32 %v499, %v493
        %v501 = vadd.f32 %v500, 1e-05
        %v502 = vrsqrt.pop %v501
        %v503 = vmul.f32 %v495, %v502
        %v505 = vlaneseq
        %v506 = vshrl.u32 %v505, 7
        %v507 = vsub.s32 0, %v506
        %v508 = vrot.slane %v487, %v507
        %v510 = vmul.f32 %v503, %v508
        %v512 = vlaneseq
        %v513 = vshrl.u32 %v512, 7
        %v514 = vsub.s32 0, %v513
        %v515 = vrot.slane %v488, %v514
        %v517 = vadd.f32 %v510, %v515
        %v518 = vpack.c.bf16 %v517, %v517
        %v519 = vld [vmem:[#allocation5] sm:$0xf]
        %v520 = vld [vmem:[#allocation5 + $0x4] sm:$0xf]
        %v521 = vld [vmem:[#allocation5 + $0x8] sm:$0xf]
        %v522 = vld [vmem:[#allocation5 + $0xc] sm:$0xf]
        %v523 = vld [vmem:[%s6] sm:$0x1]
        %v525 = vlaneseq
        %v526 = vshrl.u32 %v525, 7
        %v527 = vsub.s32 0, %v526
        %v528 = vrot.slane %v523, %v527
        %v534 = vunpack.c.l.b16 %v519
        %v535 = vunpack.c.l.b16 %v520
        %v536 = vunpack.c.l.b16 %v521
        %v537 = vunpack.c.l.b16 %v522
        %v538 = vpack.c.b16 %v535, %v534
        %v539 = vpack.c.b16 %v537, %v536
        %v543 = vsel %vm489, %v518, 0
        %545 = vmatprep.subr.bf16.mxu0 0
        %546 = vmatpush1.bf16.msra.mxu0 0
        %547 = vmatprep.subr.bf16.mxu0 0
        %548 = vmatpush1.bf16.msra.mxu0 0
        %549 = vmatprep.subr.bf16.mxu0 0
        %550 = vmatpush1.bf16.msra.mxu0 0
        %551 = vmatprep.subr.bf16.mxu0 0
        %552 = vmatpush1.bf16.msra.mxu0 0
        %553 = vmatprep.subr.bf16.mxu0 0
        %554 = vmatpush1.bf16.msra.mxu0 0
        %555 = vmatprep.subr.bf16.mxu0 0
        %556 = vmatpush1.bf16.msra.mxu0 0
        %557 = vmatprep.subr.bf16.mxu0 0
        %558 = vmatpush1.bf16.msra.mxu0 %v539
        %559 = vmatprep.subr.bf16.mxu0 0
        %560 = vmatpush1.bf16.msra.mxu0 %v538
        %561 = vmatprep.subr.bf16.mxu0 0
        %562 = vmatpush2.bf16.msra.mxu0 0
        %563 = vmatprep.subr.bf16.mxu0 0
        %564 = vmatpush2.bf16.msra.mxu0 0
        %565 = vmatprep.subr.bf16.mxu0 0
        %566 = vmatpush2.bf16.msra.mxu0 0
        %567 = vmatprep.subr.bf16.mxu0 0
        %568 = vmatpush2.bf16.msra.mxu0 0
        %569 = vmatprep.subr.bf16.mxu0 0
        %570 = vmatpush2.bf16.msra.mxu0 0
        %571 = vmatprep.subr.bf16.mxu0 0
        %572 = vmatpush2.bf16.msra.mxu0 0
        %573 = vmatprep.subr.bf16.mxu0 0
        %574 = vmatpush2.bf16.msra.mxu0 0
        %575 = vmatprep.subr.bf16.mxu0 0
        %576 = vmatpush2.bf16.msra.mxu0 0
        %577 = vmatprep.mubr.bf16.mxu0 0
        %578 = vmatmul.mubr.bf16.gmra.mxu0 %v543
        %v579 = vpop.f32.mrf.mxu0
        %v580 = vadd.f32 %v528, %v579
        %v581 = vpop.f32.mrf.mxu0
        %v582 = vpop.f32.mrf.mxu0
        %v583 = vpop.f32.mrf.mxu0
        %584 = vdwg.mxu0
        %v585 = vld [vmem:[#allocation7] sm:$0xf]
        %v586 = vld [vmem:[#allocation7 + $0x4] sm:$0xf]
        %v587 = vld [vmem:[#allocation7 + $0x8] sm:$0xf]
        %v588 = vld [vmem:[#allocation7 + $0xc] sm:$0xf]
        %v589 = vld [vmem:[%s7] sm:$0x1]
        %v591 = vlaneseq
        %v592 = vshrl.u32 %v591, 7
        %v593 = vsub.s32 0, %v592
        %v594 = vrot.slane %v589, %v593
        %v600 = vunpack.c.l.b16 %v585
        %v601 = vunpack.c.l.b16 %v586
        %v602 = vunpack.c.l.b16 %v587
        %v603 = vunpack.c.l.b16 %v588
        %v604 = vpack.c.b16 %v601, %v600
        %v605 = vpack.c.b16 %v603, %v602
        %608 = vmatprep.subr.bf16.mxu0 0
        %609 = vmatpush1.bf16.msra.mxu0 0
        %610 = vmatprep.subr.bf16.mxu0 0
        %611 = vmatpush1.bf16.msra.mxu0 0
        %612 = vmatprep.subr.bf16.mxu0 0
        %613 = vmatpush1.bf16.msra.mxu0 0
        %614 = vmatprep.subr.bf16.mxu0 0
        %615 = vmatpush1.bf16.msra.mxu0 0
        %616 = vmatprep.subr.bf16.mxu0 0
        %617 = vmatpush1.bf16.msra.mxu0 0
        %618 = vmatprep.subr.bf16.mxu0 0
        %619 = vmatpush1.bf16.msra.mxu0 0
        %620 = vmatprep.subr.bf16.mxu0 0
        %621 = vmatpush1.bf16.msra.mxu0 %v605
        %622 = vmatprep.subr.bf16.mxu0 0
        %623 = vmatpush1.bf16.msra.mxu0 %v604
        %624 = vmatprep.subr.bf16.mxu0 0
        %625 = vmatpush2.bf16.msra.mxu0 0
        %626 = vmatprep.subr.bf16.mxu0 0
        %627 = vmatpush2.bf16.msra.mxu0 0
        %628 = vmatprep.subr.bf16.mxu0 0
        %629 = vmatpush2.bf16.msra.mxu0 0
        %630 = vmatprep.subr.bf16.mxu0 0
        %631 = vmatpush2.bf16.msra.mxu0 0
        %632 = vmatprep.subr.bf16.mxu0 0
        %633 = vmatpush2.bf16.msra.mxu0 0
        %634 = vmatprep.subr.bf16.mxu0 0
        %635 = vmatpush2.bf16.msra.mxu0 0
        %636 = vmatprep.subr.bf16.mxu0 0
        %637 = vmatpush2.bf16.msra.mxu0 0
        %638 = vmatprep.subr.bf16.mxu0 0
        %639 = vmatpush2.bf16.msra.mxu0 0
        %640 = vmatprep.mubr.bf16.mxu0 0
        %641 = vmatmul.mubr.bf16.gmra.mxu0 %v543
        %v642 = vpop.f32.mrf.mxu0
        %v643 = vadd.f32 %v594, %v642
        %v644 = vpop.f32.mrf.mxu0
        %v645 = vpop.f32.mrf.mxu0
        %v646 = vpop.f32.mrf.mxu0
        %647 = vdwg.mxu0
        %v648 = vld [vmem:[#allocation8] sm:$0xf]
        %v649 = vld [vmem:[#allocation8 + $0x4] sm:$0xf]
        %v650 = vld [vmem:[#allocation8 + $0x8] sm:$0xf]
        %v651 = vld [vmem:[#allocation8 + $0xc] sm:$0xf]
        %v652 = vld [vmem:[%s8] sm:$0x1]
        %v654 = vlaneseq
        %v655 = vshrl.u32 %v654, 7
        %v656 = vsub.s32 0, %v655
        %v657 = vrot.slane %v652, %v656
        %v663 = vunpack.c.l.b16 %v648
        %v664 = vunpack.c.l.b16 %v649
        %v665 = vunpack.c.l.b16 %v650
        %v666 = vunpack.c.l.b16 %v651
        %v667 = vpack.c.b16 %v664, %v663
        %v668 = vpack.c.b16 %v666, %v665
        %671 = vmatprep.subr.bf16.mxu0 0
        %672 = vmatpush1.bf16.msra.mxu0 0
        %673 = vmatprep.subr.bf16.mxu0 0
        %674 = vmatpush1.bf16.msra.mxu0 0
        %675 = vmatprep.subr.bf16.mxu0 0
        %676 = vmatpush1.bf16.msra.mxu0 0
        %677 = vmatprep.subr.bf16.mxu0 0
        %678 = vmatpush1.bf16.msra.mxu0 0
        %679 = vmatprep.subr.bf16.mxu0 0
        %680 = vmatpush1.bf16.msra.mxu0 0
        %681 = vmatprep.subr.bf16.mxu0 0
        %682 = vmatpush1.bf16.msra.mxu0 0
        %683 = vmatprep.subr.bf16.mxu0 0
        %684 = vmatpush1.bf16.msra.mxu0 %v668
        %685 = vmatprep.subr.bf16.mxu0 0
        %686 = vmatpush1.bf16.msra.mxu0 %v667
        %687 = vmatprep.subr.bf16.mxu0 0
        %688 = vmatpush2.bf16.msra.mxu0 0
        %689 = vmatprep.subr.bf16.mxu0 0
        %690 = vmatpush2.bf16.msra.mxu0 0
        %691 = vmatprep.subr.bf16.mxu0 0
        %692 = vmatpush2.bf16.msra.mxu0 0
        %693 = vmatprep.subr.bf16.mxu0 0
        %694 = vmatpush2.bf16.msra.mxu0 0
        %695 = vmatprep.subr.bf16.mxu0 0
        %696 = vmatpush2.bf16.msra.mxu0 0
        %697 = vmatprep.subr.bf16.mxu0 0
        %698 = vmatpush2.bf16.msra.mxu0 0
        %699 = vmatprep.subr.bf16.mxu0 0
        %700 = vmatpush2.bf16.msra.mxu0 0
        %701 = vmatprep.subr.bf16.mxu0 0
        %702 = vmatpush2.bf16.msra.mxu0 0
        %703 = vmatprep.mubr.bf16.mxu0 0
        %704 = vmatmul.mubr.bf16.gmra.mxu0 %v543
        %v705 = vpop.f32.mrf.mxu0
        %v706 = vadd.f32 %v657, %v705
        %v707 = vpop.f32.mrf.mxu0
        %v708 = vpop.f32.mrf.mxu0
        %v709 = vpop.f32.mrf.mxu0
        %710 = vdwg.mxu0
        %v711 = vpack.c.bf16 %v580, %v580
        %vm712 = vcmask 257024
        %713 = vst.msk [vmem:[%s470] sm:$0xf] %vm712, %v711
        %v714 = vpack.c.bf16 %v643, %v643
        %715 = vst.msk [vmem:[%s477] sm:$0xf] %vm712, %v714
        %v716 = vpack.c.bf16 %v706, %v706
        %717 = vst.msk [vmem:[%s484] sm:$0xf] %vm712, %v716
        %s718 = sand.u32 %s252, 1
        %s719 = scalar_lea.sflag [#allocation4], %s718
        %s720 = sand.u32 %s252, 1
        %s721 = smul.addr %s720, 4
        %s722 = scalar_lea.vmem [#allocation10], %s721
        %s723 = sand.u32 %s34, 1
        %s724 = scalar_lea.sflag [#allocation12], %s723
        %s725 = sand.u32 %s280, 1
        %s726 = smul.addr %s725, 4
        %s727 = scalar_lea.vmem [#allocation11], %s726
        %s728 = sand.u32 %s34, 1
        %s729 = scalar_lea.sflag [#allocation12], %s728
        %s730 = sand.u32 %s308, 1
        %s731 = smul.addr %s730, 4
        %s732 = scalar_lea.vmem [#allocation13], %s731
        // Predicated region
        $region73: #{tpu_custom_call.1} parent=55 // pred_check
          %p733 = pneg %p262
        $region74: #{tpu_custom_call.1} parent=55 // pred_check_branch
          %735 = sbr.rel (%p733) target = $region76
        $region75: #{tpu_custom_call.1} parent=55 // pred_region
          %s737 = ssub.s32 64, 64
          %738 = vsyncadd %s719, %s737
          %s739 = sadd.s32 %s39, %s38
          %s740 = smul.addr %s739, 64
          %s741 = scalar_lea.hbm %s9, %s740
          %s743 = sshll.u32 %s722, 4
          %s744 = int_to_ptr.vmem [resolvable:$true] %s743
          %746 = dma.vmem_to_hbm [thread:$0]  %s744, 64, %s741, %s719
        $region76: #{tpu_custom_call.1} parent=55 // pred_fallthru
          _
        // Predicated region
        $region77: #{tpu_custom_call.1} parent=55 // pred_check
          %p747 = pneg %p290
        $region78: #{tpu_custom_call.1} parent=55 // pred_check_branch
          %749 = sbr.rel (%p747) target = $region80
        $region79: #{tpu_custom_call.1} parent=55 // pred_region
          %s751 = ssub.s32 64, 64
          %752 = vsyncadd %s724, %s751
          %s753 = sadd.s32 %s39, %s38
          %s754 = smul.addr %s753, 64
          %s755 = scalar_lea.hbm %s10, %s754
          %s757 = sshll.u32 %s727, 4
          %s758 = int_to_ptr.vmem [resolvable:$true] %s757
          %760 = dma.vmem_to_hbm [thread:$0]  %s758, 64, %s755, %s724
        $region80: #{tpu_custom_call.1} parent=55 // pred_fallthru
          _
        // Predicated region
        $region81: #{tpu_custom_call.1} parent=55 // pred_check
          %p761 = pneg %p318
        $region82: #{tpu_custom_call.1} parent=55 // pred_check_branch
          %763 = sbr.rel (%p761) target = $region84
        $region83: #{tpu_custom_call.1} parent=55 // pred_region
          %s765 = ssub.s32 64, 64
          %766 = vsyncadd %s729, %s765
          %s767 = sadd.s32 %s39, %s38
          %s768 = smul.addr %s767, 64
          %s769 = scalar_lea.hbm %s11, %s768
          %s771 = sshll.u32 %s732, 4
          %s772 = int_to_ptr.vmem [resolvable:$true] %s771
          %774 = dma.vmem_to_hbm [thread:$0]  %s772, 64, %s769, %s729
        $region84: #{tpu_custom_call.1} parent=55 // pred_fallthru
          _
      $region56: #{tpu_custom_call.1} parent=5 // pred_fallthru
        _
      %p775 = scmp.le.s32.totalorder 2, %s29
      // Predicated region
      $region85: #{tpu_custom_call.1} parent=5 // pred_check
        %p776 = pneg %p775
      $region86: #{tpu_custom_call.1} parent=5 // pred_check_branch
        %778 = sbr.rel (%p776) target = $region88
      $region87: #{tpu_custom_call.1} parent=5 // pred_region
        %s779 = ssub.s32 %s29, 2
        // Predicated region
        $region89: #{tpu_custom_call.1} parent=87 // pred_check
          %p780 = pneg %p268
        $region90: #{tpu_custom_call.1} parent=87 // pred_check_branch
          %782 = sbr.rel (%p780) target = $region92
        $region91: #{tpu_custom_call.1} parent=87 // pred_region
          %s783 = sand.u32 %s253, 1
          %s784 = scalar_lea.sflag [#allocation4], %s783
          %s785 = sand.u32 %s253, 1
          %s786 = smul.addr %s785, 4
          %s787 = scalar_lea.vmem [#allocation10], %s786
          %788 = dma.done %s784, 64
        $region92: #{tpu_custom_call.1} parent=87 // pred_fallthru
          _
        // Predicated region
        $region93: #{tpu_custom_call.1} parent=87 // pred_check
          %p789 = pneg %p296
        $region94: #{tpu_custom_call.1} parent=87 // pred_check_branch
          %791 = sbr.rel (%p789) target = $region96
        $region95: #{tpu_custom_call.1} parent=87 // pred_region
          %s792 = sand.u32 %s35, 1
          %s793 = scalar_lea.sflag [#allocation12], %s792
          %s794 = sand.u32 %s281, 1
          %s795 = smul.addr %s794, 4
          %s796 = scalar_lea.vmem [#allocation11], %s795
          %797 = dma.done %s793, 64
        $region96: #{tpu_custom_call.1} parent=87 // pred_fallthru
          _
        // Predicated region
        $region97: #{tpu_custom_call.1} parent=87 // pred_check
          %p798 = pneg %p324
        $region98: #{tpu_custom_call.1} parent=87 // pred_check_branch
          %800 = sbr.rel (%p798) target = $region100
        $region99: #{tpu_custom_call.1} parent=87 // pred_region
          %s801 = sand.u32 %s35, 1
          %s802 = scalar_lea.sflag [#allocation12], %s801
          %s803 = sand.u32 %s309, 1
          %s804 = smul.addr %s803, 4
          %s805 = scalar_lea.vmem [#allocation13], %s804
          %806 = dma.done %s802, 64
        $region100: #{tpu_custom_call.1} parent=87 // pred_fallthru
          _
      $region88: #{tpu_custom_call.1} parent=5 // pred_fallthru
        _
    $region6: #{tpu_custom_call.1} parent=1 // loop_footer
      %s33 = sadd.s32 1, %s29
    $region7: #{tpu_custom_call.1} parent=1 // loop_footer_branch
      %28 = sbr.rel target = $region3
    $region8: #{tpu_custom_call.1} parent=1 // loop_exit
      _
    %807 = vsyncpa [#allocation3], 1
    %s808 = scalar_lea.sflag [#allocation3], 1
    %809 = vsyncpa %s808, 1
    %810 = vsyncpa [#allocation6], 1
    %811 = vsyncpa [#allocation9], 1
    %812 = vsyncpa [#allocation4], 1
    %s813 = scalar_lea.sflag [#allocation4], 1
    %814 = vsyncpa %s813, 1
    %815 = vsyncpa [#allocation12], 1
    %s816 = scalar_lea.sflag [#allocation12], 1
    %817 = vsyncpa %s816, 1

</llo_original>
